<compile_context>
chip_gen: v7x
topology: tpu7x:2x2x1
jax: 0.10.0
libtpu: 0.0.40
codegen_flags: <defaults>
</compile_context>

<pallas_src>
import functools

import jax
import jax.numpy as jnp
from jax import lax
from jax.experimental import pallas as pl
from jax.experimental.pallas import tpu as pltpu


@functools.lru_cache(maxsize=None)
def _vmem_limit_bytes():
    cap = 128 * 1024 * 1024
    try:
        cap = int(pltpu.get_tpu_info().vmem_capacity_bytes)
    except Exception:
        pass
    return int(max(32 * 1024 * 1024, min(64 * 1024 * 1024, 0.6 * cap)))


# ----------------------------------------------------------------------------
# Fused image encoder: patch-embed matmul -> per-image mean-pool.
#   grid = (num_image_blocks,), "parallel".  IB images per grid step; the
#   patch-embed weight and the pooling matrix use constant block indices so
#   they stay resident in VMEM.
# ----------------------------------------------------------------------------

def _image_encode_kernel(patches_ref, w_patch_ref, pool_mat_ref, out_ref):
    # patches_ref: [IB*N, Dp] bf16 ; w_patch_ref: [Dp, Vw] bf16
    # pool_mat_ref: [IB, IB*N] bf16 block-diagonal mean-pool matrix (1/N).
    tok = jnp.dot(patches_ref[...], w_patch_ref[...],
                  preferred_element_type=jnp.float32)          # [IB*N, Vw] f32
    pooled = jnp.dot(pool_mat_ref[...], tok.astype(jnp.bfloat16),
                     preferred_element_type=jnp.float32)       # [IB, Vw]  f32
    out_ref[...] = pooled.astype(out_ref.dtype)


def _choose_images_per_block(g):
    for ib in (8, 4, 2, 1):
        if g % ib == 0:
            return ib
    return 1


def encode_images_pooled(patches_flat, w_patch, n_tok):
    """patches_flat [G*N, Dp] (bf16) -> mean-pooled token features [G, Vw] bf16."""
    gn, dp = patches_flat.shape
    g = gn // n_tok
    vw = w_patch.shape[1]
    ib = _choose_images_per_block(g)
    pool_mat = (jnp.repeat(jnp.eye(ib, dtype=jnp.float32), n_tok, axis=1)
                * (1.0 / float(n_tok))).astype(jnp.bfloat16)    # [ib, ib*N]

    return pl.pallas_call(
        _image_encode_kernel,
        out_shape=jax.ShapeDtypeStruct((g, vw), jnp.bfloat16),
        grid=(g // ib,),
        in_specs=[
            pl.BlockSpec((ib * n_tok, dp), lambda i: (i, 0)),
            # Constant block index -> weight DMA'd once and kept resident.
            # TODO(synk): pipeline_mode=pl.Buffered(1) to drop the second
            # (unused) weight buffer; also re-introduce a K reduction axis
            # (tile >= 256) only if Dp*Vw ever exceeds the VMEM budget.
            pl.BlockSpec((dp, vw), lambda i: (0, 0)),
            pl.BlockSpec((ib, ib * n_tok), lambda i: (0, 0)),
        ],
        out_specs=pl.BlockSpec((ib, vw), lambda i: (i, 0)),
        compiler_params=pltpu.CompilerParams(
            dimension_semantics=("parallel",),
            vmem_limit_bytes=_vmem_limit_bytes()),
    )(patches_flat, w_patch, pool_mat)


# ----------------------------------------------------------------------------
# Fused pooled-projection + slowfast head:
#   [2B, Vw] @ w_pool -> split slow/fast -> concat-equivalent matmul with
#   slowfast_projection -> F.normalize(dim=-1).  Single small block.
# ----------------------------------------------------------------------------

def _pool_slowfast_norm_kernel(pooled_ref, w_pool_ref, w_sf_ref, o_ref):
    b, e = o_ref.shape
    proj = jnp.dot(pooled_ref[...], w_pool_ref[...],
                   preferred_element_type=jnp.float32)          # [2B, E] f32
    slow = proj[:b, :].astype(jnp.bfloat16)
    fast = proj[b:, :].astype(jnp.bfloat16)
    # concat([slow, fast], -1) @ W == slow @ W[:E] + fast @ W[E:]
    y = jnp.dot(slow, w_sf_ref[:e, :], preferred_element_type=jnp.float32)
    y = y + jnp.dot(fast, w_sf_ref[e:, :], preferred_element_type=jnp.float32)
    # F.normalize(dim=-1): y * rsqrt(max(sum(y^2), 1e-24))
    ssq = jnp.sum(y * y, axis=-1, keepdims=True)
    o_ref[...] = (y * lax.rsqrt(jnp.maximum(ssq, 1e-24))).astype(o_ref.dtype)


def pool_slowfast_norm(pooled, w_pool, w_slowfast):
    g, vw = pooled.shape
    e = w_pool.shape[1]
    b = g // 2
    return pl.pallas_call(
        _pool_slowfast_norm_kernel,
        out_shape=jax.ShapeDtypeStruct((b, e), jnp.float32),
        grid=(1,),
        in_specs=[
            pl.BlockSpec((g, vw), lambda i: (0, 0)),
            pl.BlockSpec((vw, e), lambda i: (0, 0)),
            pl.BlockSpec((2 * e, e), lambda i: (0, 0)),
        ],
        out_specs=pl.BlockSpec((b, e), lambda i: (0, 0)),
        compiler_params=pltpu.CompilerParams(
            dimension_semantics=("arbitrary",),
            vmem_limit_bytes=_vmem_limit_bytes()),
    )(pooled, w_pool.astype(jnp.bfloat16), w_slowfast.astype(jnp.bfloat16))


# ----------------------------------------------------------------------------
# Text encoder: bf16 token embeddings -> mean pool over sequence (tiled,
# "arbitrary", innermost) -> text_projection -> F.normalize.
# Batch axis is tiled and "parallel" (v7x 2-TC split).
# ----------------------------------------------------------------------------

def _text_encode_kernel(tok_ref, w_text_ref, out_ref, sum_acc, *, seq_len):
    l = pl.program_id(1)

    @pl.when(l == 0)
    def _init():
        sum_acc[...] = jnp.zeros_like(sum_acc)

    # tok_ref: [bt, st, Wt] bf16; accumulate the sequence sum in f32.
    sum_acc[...] += jnp.sum(tok_ref[...].astype(jnp.float32), axis=1)

    @pl.when(l == pl.num_programs(1) - 1)
    def _finalize():
        pooled = (sum_acc[...] * (1.0 / float(seq_len))).astype(jnp.bfloat16)
        y = jnp.dot(pooled, w_text_ref[...],
                    preferred_element_type=jnp.float32)          # [bt, E] f32
        ssq = jnp.sum(y * y, axis=-1, keepdims=True)
        out_ref[...] = (y * lax.rsqrt(jnp.maximum(ssq, 1e-24))
                        ).astype(out_ref.dtype)


def _choose_batch_tile(b):
    for t in (8, 4, 2, 1):
        if b % t == 0:
            return t
    return 1


def _choose_seq_tile(l):
    if l <= 512:
        return l
    for t in range(512, 127, -128):
        if l % t == 0:
            return t
    return l


def encode_text_fused(tok_emb, w_text):
    b, l, wt = tok_emb.shape
    e = w_text.shape[1]
    bt = _choose_batch_tile(b)
    st = _choose_seq_tile(l)
    kernel = functools.partial(_text_encode_kernel, seq_len=l)
    return pl.pallas_call(
        kernel,
        out_shape=jax.ShapeDtypeStruct((b, e), jnp.float32),
        grid=(b // bt, l // st),
        in_specs=[
            pl.BlockSpec((bt, st, wt), lambda bi, li: (bi, li, 0)),
            pl.BlockSpec((wt, e), lambda bi, li: (0, 0)),
        ],
        out_specs=pl.BlockSpec((bt, e), lambda bi, li: (bi, 0)),
        scratch_shapes=[pltpu.VMEM((bt, wt), jnp.float32)],
        compiler_params=pltpu.CompilerParams(
            dimension_semantics=("parallel", "arbitrary"),
            vmem_limit_bytes=_vmem_limit_bytes()),
    )(tok_emb, w_text.astype(jnp.bfloat16))


# ----------------------------------------------------------------------------
# Model glue (plain JAX): patchify, embedding lookup, parameter init
# ----------------------------------------------------------------------------

def patchify(image, patch):
    # NCHW -> [B, N_patches, C*P*P]
    # TODO(synk): fold patch extraction into the fused kernel's DMA via a
    # patch-wise BlockSpec index_map at real resolutions.
    b, c, h, w = image.shape
    hp, wp = h // patch, w // patch
    x = image.reshape(b, c, hp, patch, wp, patch)
    x = jnp.transpose(x, (0, 2, 4, 1, 3, 5))  # [B, hp, wp, C, P, P]
    return x.reshape(b, hp * wp, c * patch * patch)


@functools.partial(jax.jit, static_argnames=("patch",))
def clip_slowfast_forward(image, image_slow, text, params, patch=8):
    # Stack slow + fast along batch -> one fused image-encoder call.
    # Row order: [image_slow; image] so the slowfast concat is (slow, fast).
    stacked = jnp.concatenate([image_slow, image], axis=0).astype(jnp.bfloat16)
    patches = patchify(stacked, patch)                          # [2B, N, Dp] bf16
    g, n_tok, dp = patches.shape
    patches_flat = patches.reshape(g * n_tok, dp)

    pooled = encode_images_pooled(                               # [2B, Vw] bf16
        patches_flat, params["w_patch"].astype(jnp.bfloat16), n_tok)

    # NOTE: `all_embed = tokens @ image_projection` from the reference forward
    # is discarded by the reference itself, so it is not computed here.
    image_embed = pool_slowfast_norm(
        pooled, params["w_pool"], params["slowfast_projection"])  # [B, E] f32

    # Text path: squeeze(); if 1-D -> unsqueeze(0) (static shape logic).
    text2 = jnp.squeeze(text)
    if text2.ndim == 1:
        text2 = text2[None, :]
    # TODO(synk): replace the HBM-materialized gather with an in-kernel gather
    # (PrefetchScalarGridSpec + manual row DMAs) to cut text-path HBM traffic.
    tok_emb = jnp.take(params["token_embedding"], text2,
                       axis=0).astype(jnp.bfloat16)              # [B, L, Wt]
    text_embed = encode_text_fused(tok_emb, params["text_projection"])

    logit_scale = jnp.exp(params["logit_scale"])
    return image_embed, text_embed, logit_scale


def init_params(key, *, embed_dim, vision_width, text_width, patch_dim,
                vocab_size):
    # TODO(synk): trunc_normal_ is approximated by plain normal draws
    # (deterministic seeds); truncation tails are negligible at these stds.
    ks = jax.random.split(key, 5)
    params = {
        "w_patch": jax.random.normal(ks[0], (patch_dim, vision_width),
                                     jnp.float32) * patch_dim ** -0.5,
        "w_pool": jax.random.normal(ks[1], (vision_width, embed_dim),
                                    jnp.float32) * vision_width ** -0.5,
        # Kept for parameter-set fidelity; its product is discarded by the
        # reference forward so it is never multiplied here.
        "image_projection": jax.random.normal(
            ks[2], (vision_width, embed_dim), jnp.float32)
            * vision_width ** -0.5,
        "text_projection": jax.random.normal(
            ks[3], (text_width, embed_dim), jnp.float32) * text_width ** -0.5,
        "slowfast_projection": jax.random.normal(
            jax.random.fold_in(key, 7), (2 * embed_dim, embed_dim),
            jnp.float32) * 1024 ** -0.5,
        "token_embedding": jax.random.normal(
            ks[4], (vocab_size, text_width), jnp.float32) * 0.02,
        "logit_scale": jnp.asarray(jnp.log(1.0 / 0.07), jnp.float32),
    }
    return params


if __name__ == "__main__":
    B, C, H, W = 2, 4, 16, 16
    PATCH = 8
    EMBED_DIM = 32
    VISION_WIDTH = 64
    TEXT_WIDTH = 48
    VOCAB = 64
    SEQ = 8

    key = jax.random.PRNGKey(0)
    k_img, k_slow, k_txt, k_par = jax.random.split(key, 4)

    image = jax.random.normal(k_img, (B, C, H, W), jnp.float32)
    image_slow = jax.random.normal(k_slow, (B, C, H, W), jnp.float32)
    text = jax.random.randint(k_txt, (B, SEQ), 0, VOCAB, jnp.int32)

    params = init_params(
        k_par,
        embed_dim=EMBED_DIM,
        vision_width=VISION_WIDTH,
        text_width=TEXT_WIDTH,
        patch_dim=C * PATCH * PATCH,
        vocab_size=VOCAB,
    )

    image_embed, text_embed, logit_scale = clip_slowfast_forward(
        image, image_slow, text, params, patch=PATCH
    )
    jax.block_until_ready((image_embed, text_embed, logit_scale))

    assert image_embed.shape == (B, EMBED_DIM)
    assert text_embed.shape == (B, EMBED_DIM)
    assert logit_scale.shape == ()
    # sanity: outputs are L2-normalized (norms computed in f32 in-kernel)
    assert jnp.allclose(jnp.linalg.norm(image_embed, axis=-1), 1.0, atol=1e-2)
    assert jnp.allclose(jnp.linalg.norm(text_embed, axis=-1), 1.0, atol=1e-2)
    print("KERNEL_OK")
</pallas_src>

<mosaic_0001>
module attributes {stable_mosaic.version = 11 : i64} {
  func.func @_image_encode_kernel(%arg0: i32, %arg1: memref<16x256xbf16, #tpu.memory_space<vmem>>, %arg2: memref<256x64xbf16, #tpu.memory_space<vmem>>, %arg3: memref<4x16xbf16, #tpu.memory_space<vmem>>, %arg4: memref<4x64xbf16, #tpu.memory_space<vmem>>) attributes {dimension_semantics = [#tpu.dimension_semantics<parallel>], iteration_bounds = array<i64: 1>, scalar_prefetch = 0 : i64, scratch_operands = 0 : i64, tpu.core_type = #tpu.core_type<tc>, window_params = [{transform_indices = @transform_0, window_bounds = array<i64: 16, 256>}, {pipeline_mode = #tpu.pipeline_mode<synchronous>, transform_indices = @transform_1, window_bounds = array<i64: 256, 64>}, {pipeline_mode = #tpu.pipeline_mode<synchronous>, transform_indices = @transform_2, window_bounds = array<i64: 4, 16>}, {transform_indices = @transform_3, window_bounds = array<i64: 4, 64>}]} {
    %c0 = arith.constant 0 : index
    %c0_0 = arith.constant 0 : index
    %0 = vector.load %arg1[%c0, %c0_0] : memref<16x256xbf16, #tpu.memory_space<vmem>>, vector<16x256xbf16>
    %c0_1 = arith.constant 0 : index
    %c0_2 = arith.constant 0 : index
    %1 = vector.load %arg2[%c0_1, %c0_2] : memref<256x64xbf16, #tpu.memory_space<vmem>>, vector<256x64xbf16>
    %cst = arith.constant dense<0.000000e+00> : vector<16x64xf32>
    %2 = tpu.matmul %0, %1, %cst {dimension_numbers = #tpu.dot_dimension_numbers<[1], [0], [0], [1], [0, 0, 1, 1], [], []>} : vector<16x256xbf16>, vector<256x64xbf16>, vector<16x64xf32> -> vector<16x64xf32>
    %c0_3 = arith.constant 0 : index
    %c0_4 = arith.constant 0 : index
    %3 = vector.load %arg3[%c0_3, %c0_4] : memref<4x16xbf16, #tpu.memory_space<vmem>>, vector<4x16xbf16>
    %4 = arith.truncf %2 : vector<16x64xf32> to vector<16x64xbf16>
    %cst_5 = arith.constant dense<0.000000e+00> : vector<4x64xf32>
    %5 = tpu.matmul %3, %4, %cst_5 {dimension_numbers = #tpu.dot_dimension_numbers<[1], [0], [0], [1], [0, 0, 1, 1], [], []>} : vector<4x16xbf16>, vector<16x64xbf16>, vector<4x64xf32> -> vector<4x64xf32>
    %6 = arith.truncf %5 : vector<4x64xf32> to vector<4x64xbf16>
    %c0_6 = arith.constant 0 : index
    %c0_7 = arith.constant 0 : index
    %7 = vector.load %arg4[%c0_6, %c0_7] : memref<4x64xbf16, #tpu.memory_space<vmem>>, vector<4x64xbf16>
    tpu.vector_store %arg4[%c0_6, %c0_7], %6 {strides = array<i32>} : memref<4x64xbf16, #tpu.memory_space<vmem>>, vector<4x64xbf16>,
    return
  }
  func.func @transform_0(%arg0: i32) -> (i32, i32) {
    %c0_i32 = arith.constant 0 : i32
    %c0_i32_0 = arith.constant 0 : i32
    return %arg0, %c0_i32 : i32, i32
  }
  func.func @transform_1(%arg0: i32) -> (i32, i32) {
    %c0_i32 = arith.constant 0 : i32
    %c0_i32_0 = arith.constant 0 : i32
    %c0_i32_1 = arith.constant 0 : i32
    return %c0_i32, %c0_i32_0 : i32, i32
  }
  func.func @transform_2(%arg0: i32) -> (i32, i32) {
    %c0_i32 = arith.constant 0 : i32
    %c0_i32_0 = arith.constant 0 : i32
    %c0_i32_1 = arith.constant 0 : i32
    return %c0_i32, %c0_i32_0 : i32, i32
  }
  func.func @transform_3(%arg0: i32) -> (i32, i32) {
    %c0_i32 = arith.constant 0 : i32
    %c0_i32_0 = arith.constant 0 : i32
    return %arg0, %c0_i32 : i32, i32
  }
}

module attributes {stable_mosaic.version = 11 : i64} {
  func.func @_pool_slowfast_norm_kernel(%arg0: i32, %arg1: memref<4x64xbf16, #tpu.memory_space<vmem>>, %arg2: memref<64x32xbf16, #tpu.memory_space<vmem>>, %arg3: memref<64x32xbf16, #tpu.memory_space<vmem>>, %arg4: memref<2x32xf32, #tpu.memory_space<vmem>>) attributes {dimension_semantics = [#tpu.dimension_semantics<arbitrary>], iteration_bounds = array<i64: 1>, scalar_prefetch = 0 : i64, scratch_operands = 0 : i64, tpu.core_type = #tpu.core_type<tc>, window_params = [{pipeline_mode = #tpu.pipeline_mode<synchronous>, transform_indices = @transform_0, window_bounds = array<i64: 4, 64>}, {pipeline_mode = #tpu.pipeline_mode<synchronous>, transform_indices = @transform_1, window_bounds = array<i64: 64, 32>}, {pipeline_mode = #tpu.pipeline_mode<synchronous>, transform_indices = @transform_2, window_bounds = array<i64: 64, 32>}, {pipeline_mode = #tpu.pipeline_mode<synchronous>, transform_indices = @transform_3, window_bounds = array<i64: 2, 32>}]} {
    %c0 = arith.constant 0 : index
    %c0_0 = arith.constant 0 : index
    %0 = vector.load %arg1[%c0, %c0_0] : memref<4x64xbf16, #tpu.memory_space<vmem>>, vector<4x64xbf16>
    %c0_1 = arith.constant 0 : index
    %c0_2 = arith.constant 0 : index
    %1 = vector.load %arg2[%c0_1, %c0_2] : memref<64x32xbf16, #tpu.memory_space<vmem>>, vector<64x32xbf16>
    %cst = arith.constant dense<0.000000e+00> : vector<4x32xf32>
    %2 = tpu.matmul %0, %1, %cst {dimension_numbers = #tpu.dot_dimension_numbers<[1], [0], [0], [1], [0, 0, 1, 1], [], []>} : vector<4x64xbf16>, vector<64x32xbf16>, vector<4x32xf32> -> vector<4x32xf32>
    %3 = vector.extract_strided_slice %2 {offsets = [0, 0], sizes = [2, 32], strides = [1, 1]} : vector<4x32xf32> to vector<2x32xf32>
    %4 = arith.truncf %3 : vector<2x32xf32> to vector<2x32xbf16>
    %5 = vector.extract_strided_slice %2 {offsets = [2, 0], sizes = [2, 32], strides = [1, 1]} : vector<4x32xf32> to vector<2x32xf32>
    %6 = arith.truncf %5 : vector<2x32xf32> to vector<2x32xbf16>
    %c0_3 = arith.constant 0 : index
    %c0_4 = arith.constant 0 : index
    %7 = vector.load %arg3[%c0_3, %c0_4] : memref<64x32xbf16, #tpu.memory_space<vmem>>, vector<32x32xbf16>
    %cst_5 = arith.constant dense<0.000000e+00> : vector<2x32xf32>
    %8 = tpu.matmul %4, %7, %cst_5 {dimension_numbers = #tpu.dot_dimension_numbers<[1], [0], [0], [1], [0, 0, 1, 1], [], []>} : vector<2x32xbf16>, vector<32x32xbf16>, vector<2x32xf32> -> vector<2x32xf32>
    %c32 = arith.constant 32 : index
    %c0_6 = arith.constant 0 : index
    %9 = vector.load %arg3[%c32, %c0_6] : memref<64x32xbf16, #tpu.memory_space<vmem>>, vector<32x32xbf16>
    %cst_7 = arith.constant dense<0.000000e+00> : vector<2x32xf32>
    %10 = tpu.matmul %6, %9, %cst_7 {dimension_numbers = #tpu.dot_dimension_numbers<[1], [0], [0], [1], [0, 0, 1, 1], [], []>} : vector<2x32xbf16>, vector<32x32xbf16>, vector<2x32xf32> -> vector<2x32xf32>
    %11 = arith.addf %8, %10 : vector<2x32xf32>
    %12 = arith.mulf %11, %11 : vector<2x32xf32>
    %cst_8 = arith.constant dense<0.000000e+00> : vector<2xf32>
    %13 = vector.multi_reduction <add>, %12, %cst_8 [1] : vector<2x32xf32> to vector<2xf32>
    %14 = vector.shape_cast %13 : vector<2xf32> to vector<2x1xf32>
    %cst_9 = arith.constant 1.000000e-24 : f32
    %15 = vector.broadcast %cst_9 : f32 to vector<2x1xf32>
    %16 = arith.maximumf %14, %15 : vector<2x1xf32>
    %17 = math.rsqrt %16 : vector<2x1xf32>
    %18 = vector.broadcast %17 : vector<2x1xf32> to vector<2x32xf32>
    %19 = arith.mulf %11, %18 : vector<2x32xf32>
    %c0_10 = arith.constant 0 : index
    %c0_11 = arith.constant 0 : index
    %20 = vector.load %arg4[%c0_10, %c0_11] : memref<2x32xf32, #tpu.memory_space<vmem>>, vector<2x32xf32>
    tpu.vector_store %arg4[%c0_10, %c0_11], %19 {strides = array<i32>} : memref<2x32xf32, #tpu.memory_space<vmem>>, vector<2x32xf32>,
    return
  }
  func.func @transform_0(%arg0: i32) -> (i32, i32) {
    %c0_i32 = arith.constant 0 : i32
    %c0_i32_0 = arith.constant 0 : i32
    %c0_i32_1 = arith.constant 0 : i32
    return %c0_i32, %c0_i32_0 : i32, i32
  }
  func.func @transform_1(%arg0: i32) -> (i32, i32) {
    %c0_i32 = arith.constant 0 : i32
    %c0_i32_0 = arith.constant 0 : i32
    %c0_i32_1 = arith.constant 0 : i32
    return %c0_i32, %c0_i32_0 : i32, i32
  }
  func.func @transform_2(%arg0: i32) -> (i32, i32) {
    %c0_i32 = arith.constant 0 : i32
    %c0_i32_0 = arith.constant 0 : i32
    %c0_i32_1 = arith.constant 0 : i32
    return %c0_i32, %c0_i32_0 : i32, i32
  }
  func.func @transform_3(%arg0: i32) -> (i32, i32) {
    %c0_i32 = arith.constant 0 : i32
    %c0_i32_0 = arith.constant 0 : i32
    %c0_i32_1 = arith.constant 0 : i32
    return %c0_i32, %c0_i32_0 : i32, i32
  }
}

module attributes {stable_mosaic.version = 11 : i64} {
  func.func @_text_encode_kernel(%arg0: i32, %arg1: i32, %arg2: memref<2x8x48xbf16, #tpu.memory_space<vmem>>, %arg3: memref<48x32xbf16, #tpu.memory_space<vmem>>, %arg4: memref<2x32xf32, #tpu.memory_space<vmem>>, %arg5: memref<2x48xf32, #tpu.memory_space<vmem>>) attributes {dimension_semantics = [#tpu.dimension_semantics<parallel>, #tpu.dimension_semantics<arbitrary>], iteration_bounds = array<i64: 1, 1>, scalar_prefetch = 0 : i64, scratch_operands = 1 : i64, tpu.core_type = #tpu.core_type<tc>, window_params = [{transform_indices = @transform_0, window_bounds = array<i64: 2, 8, 48>}, {pipeline_mode = #tpu.pipeline_mode<synchronous>, transform_indices = @transform_1, window_bounds = array<i64: 48, 32>}, {transform_indices = @transform_2, window_bounds = array<i64: 2, 32>}]} {
    %c0_i32 = arith.constant 0 : i32
    %0 = arith.cmpi eq, %arg1, %c0_i32 : i32
    %1 = arith.extui %0 : i1 to i32
    %c0_i32_0 = arith.constant 0 : i32
    %2 = arith.cmpi ne, %1, %c0_i32_0 : i32
    scf.if %2 {
      %cst_9 = arith.constant 0.000000e+00 : f32
      %12 = vector.broadcast %cst_9 : f32 to vector<2x48xf32>
      %c0_10 = arith.constant 0 : index
      %c0_11 = arith.constant 0 : index
      %13 = vector.load %arg5[%c0_10, %c0_11] : memref<2x48xf32, #tpu.memory_space<vmem>>, vector<2x48xf32>
      tpu.vector_store %arg5[%c0_10, %c0_11], %12 {strides = array<i32>} : memref<2x48xf32, #tpu.memory_space<vmem>>, vector<2x48xf32>,
    } else {
    }
    %c0 = arith.constant 0 : index
    %c0_1 = arith.constant 0 : index
    %3 = vector.load %arg5[%c0, %c0_1] : memref<2x48xf32, #tpu.memory_space<vmem>>, vector<2x48xf32>
    %c0_2 = arith.constant 0 : index
    %c0_3 = arith.constant 0 : index
    %c0_4 = arith.constant 0 : index
    %4 = vector.load %arg2[%c0_2, %c0_3, %c0_4] : memref<2x8x48xbf16, #tpu.memory_space<vmem>>, vector<2x8x48xbf16>
    %5 = arith.extf %4 : vector<2x8x48xbf16> to vector<2x8x48xf32>
    %cst = arith.constant dense<0.000000e+00> : vector<2x48xf32>
    %6 = vector.multi_reduction <add>, %5, %cst [1] : vector<2x8x48xf32> to vector<2x48xf32>
    %7 = arith.addf %3, %6 : vector<2x48xf32>
    %c0_5 = arith.constant 0 : index
    %c0_6 = arith.constant 0 : index
    %8 = vector.load %arg5[%c0_5, %c0_6] : memref<2x48xf32, #tpu.memory_space<vmem>>, vector<2x48xf32>
    tpu.vector_store %arg5[%c0_5, %c0_6], %7 {strides = array<i32>} : memref<2x48xf32, #tpu.memory_space<vmem>>, vector<2x48xf32>,
    %c0_i32_7 = arith.constant 0 : i32
    %9 = arith.cmpi eq, %arg1, %c0_i32_7 : i32
    %10 = arith.extui %9 : i1 to i32
    %c0_i32_8 = arith.constant 0 : i32
    %11 = arith.cmpi ne, %10, %c0_i32_8 : i32
    scf.if %11 {
      %c0_9 = arith.constant 0 : index
      %c0_10 = arith.constant 0 : index
      %12 = vector.load %arg5[%c0_9, %c0_10] : memref<2x48xf32, #tpu.memory_space<vmem>>, vector<2x48xf32>
      %cst_11 = arith.constant 1.250000e-01 : f32
      %13 = vector.broadcast %cst_11 : f32 to vector<2x48xf32>
      %14 = arith.mulf %12, %13 : vector<2x48xf32>
      %15 = arith.truncf %14 : vector<2x48xf32> to vector<2x48xbf16>
      %c0_12 = arith.constant 0 : index
      %c0_13 = arith.constant 0 : index
      %16 = vector.load %arg3[%c0_12, %c0_13] : memref<48x32xbf16, #tpu.memory_space<vmem>>, vector<48x32xbf16>
      %cst_14 = arith.constant dense<0.000000e+00> : vector<2x32xf32>
      %17 = tpu.matmul %15, %16, %cst_14 {dimension_numbers = #tpu.dot_dimension_numbers<[1], [0], [0], [1], [0, 0, 1, 1], [], []>} : vector<2x48xbf16>, vector<48x32xbf16>, vector<2x32xf32> -> vector<2x32xf32>
      %18 = arith.mulf %17, %17 : vector<2x32xf32>
      %cst_15 = arith.constant dense<0.000000e+00> : vector<2xf32>
      %19 = vector.multi_reduction <add>, %18, %cst_15 [1] : vector<2x32xf32> to vector<2xf32>
      %20 = vector.shape_cast %19 : vector<2xf32> to vector<2x1xf32>
      %cst_16 = arith.constant 1.000000e-24 : f32
      %21 = vector.broadcast %cst_16 : f32 to vector<2x1xf32>
      %22 = arith.maximumf %20, %21 : vector<2x1xf32>
      %23 = math.rsqrt %22 : vector<2x1xf32>
      %24 = vector.broadcast %23 : vector<2x1xf32> to vector<2x32xf32>
      %25 = arith.mulf %17, %24 : vector<2x32xf32>
      %c0_17 = arith.constant 0 : index
      %c0_18 = arith.constant 0 : index
      %26 = vector.load %arg4[%c0_17, %c0_18] : memref<2x32xf32, #tpu.memory_space<vmem>>, vector<2x32xf32>
      tpu.vector_store %arg4[%c0_17, %c0_18], %25 {strides = array<i32>} : memref<2x32xf32, #tpu.memory_space<vmem>>, vector<2x32xf32>,
    } else {
    }
    return
  }
  func.func @transform_0(%arg0: i32, %arg1: i32) -> (i32, i32, i32) {
    %c0_i32 = arith.constant 0 : i32
    %c0_i32_0 = arith.constant 0 : i32
    return %arg0, %arg1, %c0_i32 : i32, i32, i32
  }
  func.func @transform_1(%arg0: i32, %arg1: i32) -> (i32, i32) {
    %c0_i32 = arith.constant 0 : i32
    %c0_i32_0 = arith.constant 0 : i32
    %c0_i32_1 = arith.constant 0 : i32
    return %c0_i32, %c0_i32_0 : i32, i32
  }
  func.func @transform_2(%arg0: i32, %arg1: i32) -> (i32, i32) {
    %c0_i32 = arith.constant 0 : i32
    %c0_i32_0 = arith.constant 0 : i32
    return %arg0, %c0_i32 : i32, i32
  }
}

</mosaic_0001>

<llo_original>
// kernel: clip_slowfast_forward.4
$region0: #{clip_slowfast_forward.4}
  #allocation0 [shape = 'u32[]', space=smem, size = 0x4, offset = 0x4, fixed_abs, tag = 'smem constant byte address 0x4 - core index']
  #allocation1 [shape = 'u32[144,128]{1,0:T(1,128)}', space=vmem, size = 0x12000, scoped, tag = 'internal scratch']
  %s0 = inlined_call_operand.hbm [shape: bf16[4,64], index: 0, kind: input, shape index: {}]
  %s1 = inlined_call_operand.hbm [shape: bf16[64,32], index: 1, kind: input, shape index: {}]
  %s2 = inlined_call_operand.hbm [shape: bf16[64,32], index: 2, kind: input, shape index: {}]
  %s3 = inlined_call_operand.hbm [shape: f32[2,32], index: 3, kind: output, shape index: {}]
  %s4 = sld [smem:[#allocation0]]
  $region34: #{clip_slowfast_forward.4} parent=0
    _
  %s6 = ssub.s32 1, %s4
  %s7 = scalar_select 0, %s6, %s4
  $region1: #{clip_slowfast_forward.4} parent=0
    #allocation2 [shape = 'u8[1024]{0}', space=vmem, size = 0x400, scoped, tag = 'input window, operand 0, single buffered']
    #allocation3 [shape = 's32[1]{0}', space=sflag, size = 0x4, scoped, tag = 'scoped memory for clip_slowfast_forward.4']
    #allocation4 [shape = 's32[1]{0}', space=sflag, size = 0x4, scoped, tag = 'scoped memory for clip_slowfast_forward.4']
    #allocation5 [shape = 'u8[16384]{0}', space=vmem, size = 0x4000, scoped, tag = 'input window, operand 1, single buffered']
    #allocation6 [shape = 's32[1]{0}', space=sflag, size = 0x4, scoped, tag = 'scoped memory for clip_slowfast_forward.4']
    #allocation7 [shape = 'u8[16384]{0}', space=vmem, size = 0x4000, scoped, tag = 'input window, operand 2, single buffered']
    #allocation8 [shape = 'u8[1024]{0}', space=vmem, size = 0x400, scoped, tag = 'output window, operand 0, single buffered']
    %8 = vsyncpa [#allocation3], 0
    %9 = vsyncpa [#allocation6], 0
    %10 = vsyncpa [#allocation4], 0
    // Predicated region
    $region2: #{clip_slowfast_forward.4} parent=1 // pred_check
      _
    $region3: #{clip_slowfast_forward.4} parent=1 // pred_check_branch
      %12 = sbr.rel (0) target = $region5
    $region4: #{clip_slowfast_forward.4} parent=1 // pred_region
      %s14 = ssub.s32 32, 32
      %15 = vsyncadd [#allocation3], %s14
      %s17 = sshll.u32 [#allocation2], 4
      %s18 = int_to_ptr.vmem [resolvable:$true] %s17
      %20 = dma.hbm_to_vmem [thread:$0]  %s0, 32, %s18, [#allocation3]
    $region5: #{clip_slowfast_forward.4} parent=1 // pred_fallthru
      _
    // Predicated region
    $region6: #{clip_slowfast_forward.4} parent=1 // pred_check
      _
    $region7: #{clip_slowfast_forward.4} parent=1 // pred_check_branch
      %22 = sbr.rel (0) target = $region9
    $region8: #{clip_slowfast_forward.4} parent=1 // pred_region
      %s24 = ssub.s32 512, 512
      %25 = vsyncadd [#allocation6], %s24
      %s26 = sshll.u32 [#allocation5], 4
      %s27 = int_to_ptr.vmem [resolvable:$true] %s26
      %32 = dma.hbm_to_vmem [thread:$0]  %s1, 512, %s27, [#allocation6], 64, 64, 4
    $region9: #{clip_slowfast_forward.4} parent=1 // pred_fallthru
      _
    // Predicated region
    $region10: #{clip_slowfast_forward.4} parent=1 // pred_check
      _
    $region11: #{clip_slowfast_forward.4} parent=1 // pred_check_branch
      %34 = sbr.rel (0) target = $region13
    $region12: #{clip_slowfast_forward.4} parent=1 // pred_region
      %s36 = ssub.s32 512, 512
      %37 = vsyncadd [#allocation6], %s36
      %s38 = sshll.u32 [#allocation7], 4
      %s39 = int_to_ptr.vmem [resolvable:$true] %s38
      %44 = dma.hbm_to_vmem [thread:$0]  %s2, 512, %s39, [#allocation6], 64, 64, 4
    $region13: #{clip_slowfast_forward.4} parent=1 // pred_fallthru
      _
    // Predicated region
    $region14: #{clip_slowfast_forward.4} parent=1 // pred_check
      _
    $region15: #{clip_slowfast_forward.4} parent=1 // pred_check_branch
      %46 = sbr.rel (0) target = $region17
    $region16: #{clip_slowfast_forward.4} parent=1 // pred_region
      %47 = dma.done [#allocation3], 32
    $region17: #{clip_slowfast_forward.4} parent=1 // pred_fallthru
      _
    // Predicated region
    $region18: #{clip_slowfast_forward.4} parent=1 // pred_check
      _
    $region19: #{clip_slowfast_forward.4} parent=1 // pred_check_branch
      %49 = sbr.rel (0) target = $region21
    $region20: #{clip_slowfast_forward.4} parent=1 // pred_region
      %50 = dma.done [#allocation6], 512
    $region21: #{clip_slowfast_forward.4} parent=1 // pred_fallthru
      _
    // Predicated region
    $region22: #{clip_slowfast_forward.4} parent=1 // pred_check
      _
    $region23: #{clip_slowfast_forward.4} parent=1 // pred_check_branch
      %52 = sbr.rel (0) target = $region25
    $region24: #{clip_slowfast_forward.4} parent=1 // pred_region
      %53 = dma.done [#allocation6], 512
    $region25: #{clip_slowfast_forward.4} parent=1 // pred_fallthru
      _
    %v55 = vld [vmem:[#allocation2] sm:$0x3]
    %v56 = vld [vmem:[#allocation5] sm:$0xf]
    %v57 = vld [vmem:[#allocation5 + $0x4] sm:$0xf]
    %v58 = vld [vmem:[#allocation5 + $0x8] sm:$0xf]
    %v59 = vld [vmem:[#allocation5 + $0xc] sm:$0xf]
    %v60 = vld [vmem:[#allocation5 + $0x10] sm:$0xf]
    %v61 = vld [vmem:[#allocation5 + $0x14] sm:$0xf]
    %v62 = vld [vmem:[#allocation5 + $0x18] sm:$0xf]
    %v63 = vld [vmem:[#allocation5 + $0x1c] sm:$0xf]
    %v72 = vunpack.c.l.b16 %v56
    %v73 = vunpack.c.l.b16 %v57
    %v74 = vunpack.c.l.b16 %v58
    %v75 = vunpack.c.l.b16 %v59
    %v76 = vunpack.c.l.b16 %v60
    %v77 = vunpack.c.l.b16 %v61
    %v78 = vunpack.c.l.b16 %v62
    %v79 = vunpack.c.l.b16 %v63
    %v80 = vpack.c.b16 %v73, %v72
    %v81 = vpack.c.b16 %v75, %v74
    %v82 = vpack.c.b16 %v77, %v76
    %v83 = vpack.c.b16 %v79, %v78
    %vm88 = vcmask 523264
    %v90 = vsel %vm88, %v55, 0
    %92 = vmatprep.subr.bf16.mxu0 0
    %93 = vmatpush1.bf16.msra.mxu0 %v80
    %94 = vmatprep.subr.bf16.mxu0 0
    %95 = vmatpush1.bf16.msra.mxu0 %v81
    %96 = vmatprep.subr.bf16.mxu0 0
    %97 = vmatpush1.bf16.msra.mxu0 %v82
    %98 = vmatprep.subr.bf16.mxu0 0
    %99 = vmatpush1.bf16.msra.mxu0 %v83
    %100 = vmatprep.subr.bf16.mxu0 0
    %101 = vmatpush1.bf16.msra.mxu0 0
    %102 = vmatprep.subr.bf16.mxu0 0
    %103 = vmatpush1.bf16.msra.mxu0 0
    %104 = vmatprep.subr.bf16.mxu0 0
    %105 = vmatpush1.bf16.msra.mxu0 0
    %106 = vmatprep.subr.bf16.mxu0 0
    %107 = vmatpush1.bf16.msra.mxu0 0
    %108 = vmatprep.subr.bf16.mxu0 0
    %109 = vmatpush1.bf16.msra.mxu0 0
    %110 = vmatprep.subr.bf16.mxu0 0
    %111 = vmatpush1.bf16.msra.mxu0 0
    %112 = vmatprep.subr.bf16.mxu0 0
    %113 = vmatpush1.bf16.msra.mxu0 0
    %114 = vmatprep.subr.bf16.mxu0 0
    %115 = vmatpush1.bf16.msra.mxu0 0
    %116 = vmatprep.subr.bf16.mxu0 0
    %117 = vmatpush1.bf16.msra.mxu0 0
    %118 = vmatprep.subr.bf16.mxu0 0
    %119 = vmatpush1.bf16.msra.mxu0 0
    %120 = vmatprep.subr.bf16.mxu0 0
    %121 = vmatpush1.bf16.msra.mxu0 0
    %122 = vmatprep.subr.bf16.mxu0 0
    %123 = vmatpush1.bf16.msra.mxu0 0
    %124 = vmatprep.mubr.bf16.mxu0 0
    %125 = vmatmul.mubr.bf16.gmra.mrb[0].mxu0 %v90
    %v126 = vpop.f32.mrb[0].mxu0
    %v127 = vadd.f32 0.0, %v126
    %v128 = vpop.f32.mrb[0].mxu0
    %v129 = vpop.f32.mrb[0].mxu0
    %v130 = vpop.f32.mrb[0].mxu0
    %131 = vdwg.mxu0
    %v132 = vpack.c.bf16 %v127, %v127
    %v133 = vld [vmem:[#allocation7] sm:$0xf]
    %v134 = vld [vmem:[#allocation7 + $0x4] sm:$0xf]
    %v135 = vld [vmem:[#allocation7 + $0x8] sm:$0xf]
    %v136 = vld [vmem:[#allocation7 + $0xc] sm:$0xf]
    %v137 = vld [vmem:[#allocation7 + $0x10] sm:$0xf]
    %v138 = vld [vmem:[#allocation7 + $0x14] sm:$0xf]
    %v139 = vld [vmem:[#allocation7 + $0x18] sm:$0xf]
    %v140 = vld [vmem:[#allocation7 + $0x1c] sm:$0xf]
    %v142 = vrot.slane %v132, 1
    %v147 = vunpack.c.l.b16 %v137
    %v148 = vunpack.c.l.b16 %v138
    %v149 = vunpack.c.l.b16 %v139
    %v150 = vunpack.c.l.b16 %v140
    %v151 = vpack.c.b16 %v148, %v147
    %v152 = vpack.c.b16 %v150, %v149
    %vm155 = vcmask 261120
    %v157 = vsel %vm155, %v142, 0
    %159 = vmatprep.subr.bf16.mxu0 0
    %160 = vmatpush1.bf16.msra.mxu0 %v151
    %161 = vmatprep.subr.bf16.mxu0 0
    %162 = vmatpush1.bf16.msra.mxu0 %v152
    %163 = vmatprep.subr.bf16.mxu0 0
    %164 = vmatpush1.bf16.msra.mxu0 0
    %165 = vmatprep.subr.bf16.mxu0 0
    %166 = vmatpush1.bf16.msra.mxu0 0
    %167 = vmatprep.subr.bf16.mxu0 0
    %168 = vmatpush1.bf16.msra.mxu0 0
    %169 = vmatprep.subr.bf16.mxu0 0
    %170 = vmatpush1.bf16.msra.mxu0 0
    %171 = vmatprep.subr.bf16.mxu0 0
    %172 = vmatpush1.bf16.msra.mxu0 0
    %173 = vmatprep.subr.bf16.mxu0 0
    %174 = vmatpush1.bf16.msra.mxu0 0
    %175 = vmatprep.subr.bf16.mxu0 0
    %176 = vmatpush1.bf16.msra.mxu0 0
    %177 = vmatprep.subr.bf16.mxu0 0
    %178 = vmatpush1.bf16.msra.mxu0 0
    %179 = vmatprep.subr.bf16.mxu0 0
    %180 = vmatpush1.bf16.msra.mxu0 0
    %181 = vmatprep.subr.bf16.mxu0 0
    %182 = vmatpush1.bf16.msra.mxu0 0
    %183 = vmatprep.subr.bf16.mxu0 0
    %184 = vmatpush1.bf16.msra.mxu0 0
    %185 = vmatprep.subr.bf16.mxu0 0
    %186 = vmatpush1.bf16.msra.mxu0 0
    %187 = vmatprep.subr.bf16.mxu0 0
    %188 = vmatpush1.bf16.msra.mxu0 0
    %189 = vmatprep.subr.bf16.mxu0 0
    %190 = vmatpush1.bf16.msra.mxu0 0
    %191 = vmatprep.mubr.bf16.mxu0 0
    %192 = vmatmul.mubr.bf16.gmra.mrb[0].mxu0 %v157
    %v193 = vpop.f32.mrb[0].mxu0
    %v194 = vadd.f32 0.0, %v193
    %v195 = vpop.f32.mrb[0].mxu0
    %v196 = vpop.f32.mrb[0].mxu0
    %v197 = vpop.f32.mrb[0].mxu0
    %198 = vdwg.mxu0
    %v203 = vunpack.c.l.b16 %v133
    %v204 = vunpack.c.l.b16 %v134
    %v205 = vunpack.c.l.b16 %v135
    %v206 = vunpack.c.l.b16 %v136
    %v207 = vpack.c.b16 %v204, %v203
    %v208 = vpack.c.b16 %v206, %v205
    %v212 = vsel %vm155, %v132, 0
    %214 = vmatprep.subr.bf16.mxu0 0
    %215 = vmatpush1.bf16.msra.mxu0 %v207
    %216 = vmatprep.subr.bf16.mxu0 0
    %217 = vmatpush1.bf16.msra.mxu0 %v208
    %218 = vmatprep.subr.bf16.mxu0 0
    %219 = vmatpush1.bf16.msra.mxu0 0
    %220 = vmatprep.subr.bf16.mxu0 0
    %221 = vmatpush1.bf16.msra.mxu0 0
    %222 = vmatprep.subr.bf16.mxu0 0
    %223 = vmatpush1.bf16.msra.mxu0 0
    %224 = vmatprep.subr.bf16.mxu0 0
    %225 = vmatpush1.bf16.msra.mxu0 0
    %226 = vmatprep.subr.bf16.mxu0 0
    %227 = vmatpush1.bf16.msra.mxu0 0
    %228 = vmatprep.subr.bf16.mxu0 0
    %229 = vmatpush1.bf16.msra.mxu0 0
    %230 = vmatprep.subr.bf16.mxu0 0
    %231 = vmatpush1.bf16.msra.mxu0 0
    %232 = vmatprep.subr.bf16.mxu0 0
    %233 = vmatpush1.bf16.msra.mxu0 0
    %234 = vmatprep.subr.bf16.mxu0 0
    %235 = vmatpush1.bf16.msra.mxu0 0
    %236 = vmatprep.subr.bf16.mxu0 0
    %237 = vmatpush1.bf16.msra.mxu0 0
    %238 = vmatprep.subr.bf16.mxu0 0
    %239 = vmatpush1.bf16.msra.mxu0 0
    %240 = vmatprep.subr.bf16.mxu0 0
    %241 = vmatpush1.bf16.msra.mxu0 0
    %242 = vmatprep.subr.bf16.mxu0 0
    %243 = vmatpush1.bf16.msra.mxu0 0
    %244 = vmatprep.subr.bf16.mxu0 0
    %245 = vmatpush1.bf16.msra.mxu0 0
    %246 = vmatprep.mubr.bf16.mxu0 0
    %247 = vmatmul.mubr.bf16.gmra.mrb[0].mxu0 %v212
    %v248 = vpop.f32.mrb[0].mxu0
    %v249 = vadd.f32 %v194, %v248
    %v250 = vpop.f32.mrb[0].mxu0
    %v251 = vpop.f32.mrb[0].mxu0
    %v252 = vpop.f32.mrb[0].mxu0
    %253 = vdwg.mxu0
    %v254 = vmul.f32 %v249, %v249
    %vm255 = vcmask 254976
    %v256 = vsel %vm255, %v254, 0.0
    %257 = vadd.xlane.f32.xlu0 %v256
    %v258 = vpop.xlane.xlu0 %257
    %v259 = vmax.f32 %v258, 1e-24
    %v260 = vrsqrt.pop %v259
    %v261 = vmul.f32 %v249, %v260
    %262 = vst.msk [vmem:[#allocation8] sm:$0x3] %vm255, %v261
    // Predicated region
    $region26: #{clip_slowfast_forward.4} parent=1 // pred_check
      _
    $region27: #{clip_slowfast_forward.4} parent=1 // pred_check_branch
      %264 = sbr.rel (0) target = $region29
    $region28: #{clip_slowfast_forward.4} parent=1 // pred_region
      %s266 = ssub.s32 32, 32
      %267 = vsyncadd [#allocation4], %s266
      %s269 = sshll.u32 [#allocation8], 4
      %s270 = int_to_ptr.vmem [resolvable:$true] %s269
      %272 = dma.vmem_to_hbm [thread:$0]  %s270, 32, %s3, [#allocation4]
    $region29: #{clip_slowfast_forward.4} parent=1 // pred_fallthru
      _
    // Predicated region
    $region30: #{clip_slowfast_forward.4} parent=1 // pred_check
      _
    $region31: #{clip_slowfast_forward.4} parent=1 // pred_check_branch
      %274 = sbr.rel (0) target = $region33
    $region32: #{clip_slowfast_forward.4} parent=1 // pred_region
      %275 = dma.done [#allocation4], 32
    $region33: #{clip_slowfast_forward.4} parent=1 // pred_fallthru
      _
    %276 = vsyncpa [#allocation3], 1
    %277 = vsyncpa [#allocation6], 1
    %278 = vsyncpa [#allocation4], 1

// kernel: clip_slowfast_forward.3
$region0: #{clip_slowfast_forward.3}
  #allocation0 [shape = 'u32[]', space=smem, size = 0x4, offset = 0x4, fixed_abs, tag = 'smem constant byte address 0x4 - core index']
  #allocation1 [shape = 'u32[144,128]{1,0:T(1,128)}', space=vmem, size = 0x12000, scoped, tag = 'internal scratch']
  %s0 = inlined_call_operand.hbm [shape: bf16[16,256], index: 0, kind: input, shape index: {}]
  %s1 = inlined_call_operand.hbm [shape: bf16[256,64], index: 1, kind: input, shape index: {}]
  %s2 = inlined_call_operand.hbm [shape: bf16[4,16], index: 2, kind: input, shape index: {}]
  %s3 = inlined_call_operand.hbm [shape: bf16[4,64], index: 3, kind: output, shape index: {}]
  %s4 = sld [smem:[#allocation0]]
  $region34: #{clip_slowfast_forward.3} parent=0
    _
  %s6 = ssub.s32 1, %s4
  %s7 = scalar_select 0, %s6, %s4
  $region1: #{clip_slowfast_forward.3} parent=0
    #allocation2 [shape = 'u8[8192]{0}', space=vmem, size = 0x2000, scoped, tag = 'input window, operand 0, single buffered']
    #allocation3 [shape = 's32[1]{0}', space=sflag, size = 0x4, scoped, tag = 'scoped memory for clip_slowfast_forward.3']
    #allocation4 [shape = 's32[1]{0}', space=sflag, size = 0x4, scoped, tag = 'scoped memory for clip_slowfast_forward.3']
    #allocation5 [shape = 'u8[65536]{0}', space=vmem, size = 0x10000, scoped, tag = 'input window, operand 1, single buffered']
    #allocation6 [shape = 's32[1]{0}', space=sflag, size = 0x4, scoped, tag = 'scoped memory for clip_slowfast_forward.3']
    #allocation7 [shape = 'u8[1024]{0}', space=vmem, size = 0x400, scoped, tag = 'input window, operand 2, single buffered']
    #allocation8 [shape = 'u8[1024]{0}', space=vmem, size = 0x400, scoped, tag = 'output window, operand 0, single buffered']
    %8 = vsyncpa [#allocation3], 0
    %9 = vsyncpa [#allocation6], 0
    %10 = vsyncpa [#allocation4], 0
    // Predicated region
    $region2: #{clip_slowfast_forward.3} parent=1 // pred_check
      _
    $region3: #{clip_slowfast_forward.3} parent=1 // pred_check_branch
      %12 = sbr.rel (0) target = $region5
    $region4: #{clip_slowfast_forward.3} parent=1 // pred_region
      %s14 = ssub.s32 256, 256
      %15 = vsyncadd [#allocation3], %s14
      %s16 = sshll.u32 [#allocation2], 4
      %s17 = int_to_ptr.vmem [resolvable:$true] %s16
      %22 = dma.hbm_to_vmem [thread:$0]  %s0, 256, %s17, [#allocation3], 128, 128, 8
    $region5: #{clip_slowfast_forward.3} parent=1 // pred_fallthru
      _
    // Predicated region
    $region6: #{clip_slowfast_forward.3} parent=1 // pred_check
      _
    $region7: #{clip_slowfast_forward.3} parent=1 // pred_check_branch
      %24 = sbr.rel (0) target = $region9
    $region8: #{clip_slowfast_forward.3} parent=1 // pred_region
      %s26 = ssub.s32 2048, 2048
      %27 = vsyncadd [#allocation6], %s26
      %s28 = sshll.u32 [#allocation5], 4
      %s29 = int_to_ptr.vmem [resolvable:$true] %s28
      %34 = dma.hbm_to_vmem [thread:$0]  %s1, 2048, %s29, [#allocation6], 64, 64, 4
    $region9: #{clip_slowfast_forward.3} parent=1 // pred_fallthru
      _
    // Predicated region
    $region10: #{clip_slowfast_forward.3} parent=1 // pred_check
      _
    $region11: #{clip_slowfast_forward.3} parent=1 // pred_check_branch
      %36 = sbr.rel (0) target = $region13
    $region12: #{clip_slowfast_forward.3} parent=1 // pred_region
      %s38 = ssub.s32 32, 32
      %39 = vsyncadd [#allocation6], %s38
      %s41 = sshll.u32 [#allocation7], 4
      %s42 = int_to_ptr.vmem [resolvable:$true] %s41
      %44 = dma.hbm_to_vmem [thread:$0]  %s2, 32, %s42, [#allocation6]
    $region13: #{clip_slowfast_forward.3} parent=1 // pred_fallthru
      _
    // Predicated region
    $region14: #{clip_slowfast_forward.3} parent=1 // pred_check
      _
    $region15: #{clip_slowfast_forward.3} parent=1 // pred_check_branch
      %46 = sbr.rel (0) target = $region17
    $region16: #{clip_slowfast_forward.3} parent=1 // pred_region
      %47 = dma.done [#allocation3], 256
    $region17: #{clip_slowfast_forward.3} parent=1 // pred_fallthru
      _
    // Predicated region
    $region18: #{clip_slowfast_forward.3} parent=1 // pred_check
      _
    $region19: #{clip_slowfast_forward.3} parent=1 // pred_check_branch
      %49 = sbr.rel (0) target = $region21
    $region20: #{clip_slowfast_forward.3} parent=1 // pred_region
      %50 = dma.done [#allocation6], 2048
    $region21: #{clip_slowfast_forward.3} parent=1 // pred_fallthru
      _
    // Predicated region
    $region22: #{clip_slowfast_forward.3} parent=1 // pred_check
      _
    $region23: #{clip_slowfast_forward.3} parent=1 // pred_check_branch
      %52 = sbr.rel (0) target = $region25
    $region24: #{clip_slowfast_forward.3} parent=1 // pred_region
      %53 = dma.done [#allocation6], 32
    $region25: #{clip_slowfast_forward.3} parent=1 // pred_fallthru
      _
    %v55 = vld [vmem:[#allocation2] sm:$0xff]
    %v56 = vld [vmem:[#allocation2 + $0x8] sm:$0xff]
    %v57 = vld [vmem:[#allocation5] sm:$0xf]
    %v58 = vld [vmem:[#allocation5 + $0x4] sm:$0xf]
    %v59 = vld [vmem:[#allocation5 + $0x8] sm:$0xf]
    %v60 = vld [vmem:[#allocation5 + $0xc] sm:$0xf]
    %v61 = vld [vmem:[#allocation5 + $0x10] sm:$0xf]
    %v62 = vld [vmem:[#allocation5 + $0x14] sm:$0xf]
    %v63 = vld [vmem:[#allocation5 + $0x18] sm:$0xf]
    %v64 = vld [vmem:[#allocation5 + $0x1c] sm:$0xf]
    %v65 = vld [vmem:[#allocation5 + $0x20] sm:$0xf]
    %v66 = vld [vmem:[#allocation5 + $0x24] sm:$0xf]
    %v67 = vld [vmem:[#allocation5 + $0x28] sm:$0xf]
    %v68 = vld [vmem:[#allocation5 + $0x2c] sm:$0xf]
    %v69 = vld [vmem:[#allocation5 + $0x30] sm:$0xf]
    %v70 = vld [vmem:[#allocation5 + $0x34] sm:$0xf]
    %v71 = vld [vmem:[#allocation5 + $0x38] sm:$0xf]
    %v72 = vld [vmem:[#allocation5 + $0x3c] sm:$0xf]
    %v73 = vld [vmem:[#allocation5 + $0x40] sm:$0xf]
    %v74 = vld [vmem:[#allocation5 + $0x44] sm:$0xf]
    %v75 = vld [vmem:[#allocation5 + $0x48] sm:$0xf]
    %v76 = vld [vmem:[#allocation5 + $0x4c] sm:$0xf]
    %v77 = vld [vmem:[#allocation5 + $0x50] sm:$0xf]
    %v78 = vld [vmem:[#allocation5 + $0x54] sm:$0xf]
    %v79 = vld [vmem:[#allocation5 + $0x58] sm:$0xf]
    %v80 = vld [vmem:[#allocation5 + $0x5c] sm:$0xf]
    %v81 = vld [vmem:[#allocation5 + $0x60] sm:$0xf]
    %v82 = vld [vmem:[#allocation5 + $0x64] sm:$0xf]
    %v83 = vld [vmem:[#allocation5 + $0x68] sm:$0xf]
    %v84 = vld [vmem:[#allocation5 + $0x6c] sm:$0xf]
    %v85 = vld [vmem:[#allocation5 + $0x70] sm:$0xf]
    %v86 = vld [vmem:[#allocation5 + $0x74] sm:$0xf]
    %v87 = vld [vmem:[#allocation5 + $0x78] sm:$0xf]
    %v88 = vld [vmem:[#allocation5 + $0x7c] sm:$0xf]
    %v91 = vunpack.c.l.b16 %v55
    %v92 = vunpack.c.h.b16 %v55
    %v93 = vunpack.c.l.b16 %v56
    %v94 = vunpack.c.h.b16 %v56
    %v95 = vpack.c.b16 %v93, %v91
    %v96 = vpack.c.b16 %v94, %v92
    %v131 = vunpack.c.l.b16 %v57
    %v132 = vunpack.c.l.b16 %v58
    %v133 = vunpack.c.l.b16 %v59
    %v134 = vunpack.c.l.b16 %v60
    %v135 = vunpack.c.l.b16 %v61
    %v136 = vunpack.c.l.b16 %v62
    %v137 = vunpack.c.l.b16 %v63
    %v138 = vunpack.c.l.b16 %v64
    %v139 = vunpack.c.l.b16 %v65
    %v140 = vunpack.c.l.b16 %v66
    %v141 = vunpack.c.l.b16 %v67
    %v142 = vunpack.c.l.b16 %v68
    %v143 = vunpack.c.l.b16 %v69
    %v144 = vunpack.c.l.b16 %v70
    %v145 = vunpack.c.l.b16 %v71
    %v146 = vunpack.c.l.b16 %v72
    %v147 = vunpack.c.l.b16 %v73
    %v148 = vunpack.c.l.b16 %v74
    %v149 = vunpack.c.l.b16 %v75
    %v150 = vunpack.c.l.b16 %v76
    %v151 = vunpack.c.l.b16 %v77
    %v152 = vunpack.c.l.b16 %v78
    %v153 = vunpack.c.l.b16 %v79
    %v154 = vunpack.c.l.b16 %v80
    %v155 = vunpack.c.l.b16 %v81
    %v156 = vunpack.c.l.b16 %v82
    %v157 = vunpack.c.l.b16 %v83
    %v158 = vunpack.c.l.b16 %v84
    %v159 = vunpack.c.l.b16 %v85
    %v160 = vunpack.c.l.b16 %v86
    %v161 = vunpack.c.l.b16 %v87
    %v162 = vunpack.c.l.b16 %v88
    %v163 = vpack.c.b16 %v132, %v131
    %v164 = vpack.c.b16 %v134, %v133
    %v165 = vpack.c.b16 %v136, %v135
    %v166 = vpack.c.b16 %v138, %v137
    %v167 = vpack.c.b16 %v140, %v139
    %v168 = vpack.c.b16 %v142, %v141
    %v169 = vpack.c.b16 %v144, %v143
    %v170 = vpack.c.b16 %v146, %v145
    %v171 = vpack.c.b16 %v148, %v147
    %v172 = vpack.c.b16 %v150, %v149
    %v173 = vpack.c.b16 %v152, %v151
    %v174 = vpack.c.b16 %v154, %v153
    %v175 = vpack.c.b16 %v156, %v155
    %v176 = vpack.c.b16 %v158, %v157
    %v177 = vpack.c.b16 %v160, %v159
    %v178 = vpack.c.b16 %v162, %v161
    %195 = vmatprep.subr.bf16.mxu0 0
    %196 = vmatpush1.bf16.msra.mxu0 %v163
    %197 = vmatprep.subr.bf16.mxu0 0
    %198 = vmatpush1.bf16.msra.mxu0 %v164
    %199 = vmatprep.subr.bf16.mxu0 0
    %200 = vmatpush1.bf16.msra.mxu0 %v165
    %201 = vmatprep.subr.bf16.mxu0 0
    %202 = vmatpush1.bf16.msra.mxu0 %v166
    %203 = vmatprep.subr.bf16.mxu0 0
    %204 = vmatpush1.bf16.msra.mxu0 %v167
    %205 = vmatprep.subr.bf16.mxu0 0
    %206 = vmatpush1.bf16.msra.mxu0 %v168
    %207 = vmatprep.subr.bf16.mxu0 0
    %208 = vmatpush1.bf16.msra.mxu0 %v169
    %209 = vmatprep.subr.bf16.mxu0 0
    %210 = vmatpush1.bf16.msra.mxu0 %v170
    %211 = vmatprep.subr.bf16.mxu0 0
    %212 = vmatpush1.bf16.msra.mxu0 %v171
    %213 = vmatprep.subr.bf16.mxu0 0
    %214 = vmatpush1.bf16.msra.mxu0 %v172
    %215 = vmatprep.subr.bf16.mxu0 0
    %216 = vmatpush1.bf16.msra.mxu0 %v173
    %217 = vmatprep.subr.bf16.mxu0 0
    %218 = vmatpush1.bf16.msra.mxu0 %v174
    %219 = vmatprep.subr.bf16.mxu0 0
    %220 = vmatpush1.bf16.msra.mxu0 %v175
    %221 = vmatprep.subr.bf16.mxu0 0
    %222 = vmatpush1.bf16.msra.mxu0 %v176
    %223 = vmatprep.subr.bf16.mxu0 0
    %224 = vmatpush1.bf16.msra.mxu0 %v177
    %225 = vmatprep.subr.bf16.mxu0 0
    %226 = vmatpush1.bf16.msra.mxu0 %v178
    %227 = vmatprep.mubr.bf16.mxu0 %v96
    %228 = vmatmul.mubr.bf16.gmra.mrb[0].mxu0 %v95
    %v229 = vpop.f32.mrb[0].mxu0
    %v230 = vadd.f32 0.0, %v229
    %v231 = vpop.f32.mrb[0].mxu0
    %v232 = vpop.f32.mrb[0].mxu0
    %v233 = vadd.f32 0.0, %v232
    %v234 = vpop.f32.mrb[0].mxu0
    %235 = vdwg.mxu0
    %v236 = vld [vmem:[#allocation7] sm:$0x3]
    %v237 = vpack.c.bf16 %v233, %v230
    %vm238 = vcmask 130048
    %v240 = vsel %vm238, %v236, 0
    %242 = vmatprep.subr.bf16.mxu0 0
    %243 = vmatpush1.bf16.msra.mxu0 %v237
    %244 = vmatprep.subr.bf16.mxu0 0
    %245 = vmatpush1.bf16.msra.mxu0 0
    %246 = vmatprep.subr.bf16.mxu0 0
    %247 = vmatpush1.bf16.msra.mxu0 0
    %248 = vmatprep.subr.bf16.mxu0 0
    %249 = vmatpush1.bf16.msra.mxu0 0
    %250 = vmatprep.subr.bf16.mxu0 0
    %251 = vmatpush1.bf16.msra.mxu0 0
    %252 = vmatprep.subr.bf16.mxu0 0
    %253 = vmatpush1.bf16.msra.mxu0 0
    %254 = vmatprep.subr.bf16.mxu0 0
    %255 = vmatpush1.bf16.msra.mxu0 0
    %256 = vmatprep.subr.bf16.mxu0 0
    %257 = vmatpush1.bf16.msra.mxu0 0
    %258 = vmatprep.subr.bf16.mxu0 0
    %259 = vmatpush1.bf16.msra.mxu0 0
    %260 = vmatprep.subr.bf16.mxu0 0
    %261 = vmatpush1.bf16.msra.mxu0 0
    %262 = vmatprep.subr.bf16.mxu0 0
    %263 = vmatpush1.bf16.msra.mxu0 0
    %264 = vmatprep.subr.bf16.mxu0 0
    %265 = vmatpush1.bf16.msra.mxu0 0
    %266 = vmatprep.subr.bf16.mxu0 0
    %267 = vmatpush1.bf16.msra.mxu0 0
    %268 = vmatprep.subr.bf16.mxu0 0
    %269 = vmatpush1.bf16.msra.mxu0 0
    %270 = vmatprep.subr.bf16.mxu0 0
    %271 = vmatpush1.bf16.msra.mxu0 0
    %272 = vmatprep.subr.bf16.mxu0 0
    %273 = vmatpush1.bf16.msra.mxu0 0
    %274 = vmatprep.mubr.bf16.mxu0 0
    %275 = vmatmul.mubr.bf16.gmra.mrb[0].mxu0 %v240
    %v276 = vpop.f32.mrb[0].mxu0
    %v277 = vadd.f32 0.0, %v276
    %v278 = vpop.f32.mrb[0].mxu0
    %v279 = vpop.f32.mrb[0].mxu0
    %v280 = vpop.f32.mrb[0].mxu0
    %281 = vdwg.mxu0
    %v282 = vpack.c.bf16 %v277, %v277
    %vm283 = vcmask 517120
    %284 = vst.msk [vmem:[#allocation8] sm:$0x3] %vm283, %v282
    // Predicated region
    $region26: #{clip_slowfast_forward.3} parent=1 // pred_check
      _
    $region27: #{clip_slowfast_forward.3} parent=1 // pred_check_branch
      %286 = sbr.rel (0) target = $region29
    $region28: #{clip_slowfast_forward.3} parent=1 // pred_region
      %s288 = ssub.s32 32, 32
      %289 = vsyncadd [#allocation4], %s288
      %s291 = sshll.u32 [#allocation8], 4
      %s292 = int_to_ptr.vmem [resolvable:$true] %s291
      %294 = dma.vmem_to_hbm [thread:$0]  %s292, 32, %s3, [#allocation4]
    $region29: #{clip_slowfast_forward.3} parent=1 // pred_fallthru
      _
    // Predicated region
    $region30: #{clip_slowfast_forward.3} parent=1 // pred_check
      _
    $region31: #{clip_slowfast_forward.3} parent=1 // pred_check_branch
      %296 = sbr.rel (0) target = $region33
    $region32: #{clip_slowfast_forward.3} parent=1 // pred_region
      %297 = dma.done [#allocation4], 32
    $region33: #{clip_slowfast_forward.3} parent=1 // pred_fallthru
      _
    %298 = vsyncpa [#allocation3], 1
    %299 = vsyncpa [#allocation6], 1
    %300 = vsyncpa [#allocation4], 1

// kernel: clip_slowfast_forward.5
$region0: #{clip_slowfast_forward.5}
  #allocation0 [shape = 'u32[]', space=smem, size = 0x4, offset = 0x4, fixed_abs, tag = 'smem constant byte address 0x4 - core index']
  #allocation1 [shape = 'u32[144,128]{1,0:T(1,128)}', space=vmem, size = 0x12000, scoped, tag = 'internal scratch']
  #allocation2 [shape = 'f32[2,48]{1,0:T(2,128)}', space=vmem, size = 0x400, scoped, tag = 'scratch operand']
  %s0 = inlined_call_operand.hbm [shape: bf16[2,8,48], index: 0, kind: input, shape index: {}]
  %s1 = inlined_call_operand.hbm [shape: bf16[48,32], index: 1, kind: input, shape index: {}]
  %s2 = inlined_call_operand.hbm [shape: f32[2,32], index: 2, kind: output, shape index: {}]
  %s3 = sld [smem:[#allocation0]]
  $region34: #{clip_slowfast_forward.5} parent=0
    _
  %s5 = ssub.s32 1, %s3
  %s6 = scalar_select 0, %s5, %s3
  $region1: #{clip_slowfast_forward.5} parent=0
    #allocation3 [shape = 'u8[4096]{0}', space=vmem, size = 0x1000, scoped, tag = 'input window, operand 0, single buffered']
    #allocation4 [shape = 's32[1]{0}', space=sflag, size = 0x4, scoped, tag = 'scoped memory for clip_slowfast_forward.5']
    #allocation5 [shape = 's32[1]{0}', space=sflag, size = 0x4, scoped, tag = 'scoped memory for clip_slowfast_forward.5']
    #allocation6 [shape = 'u8[12288]{0}', space=vmem, size = 0x3000, scoped, tag = 'input window, operand 1, single buffered']
    #allocation7 [shape = 's32[1]{0}', space=sflag, size = 0x4, scoped, tag = 'scoped memory for clip_slowfast_forward.5']
    #allocation8 [shape = 'u8[1024]{0}', space=vmem, size = 0x400, scoped, tag = 'output window, operand 0, single buffered']
    %7 = vsyncpa [#allocation4], 0
    %8 = vsyncpa [#allocation7], 0
    %9 = vsyncpa [#allocation5], 0
    // Predicated region
    $region2: #{clip_slowfast_forward.5} parent=1 // pred_check
      _
    $region3: #{clip_slowfast_forward.5} parent=1 // pred_check_branch
      %11 = sbr.rel (0) target = $region5
    $region4: #{clip_slowfast_forward.5} parent=1 // pred_region
      %s13 = ssub.s32 128, 128
      %14 = vsyncadd [#allocation4], %s13
      %s15 = sshll.u32 [#allocation3], 4
      %s16 = int_to_ptr.vmem [resolvable:$true] %s15
      %21 = dma.hbm_to_vmem [thread:$0]  %s0, 128, %s16, [#allocation4], 64, 64, 4
    $region5: #{clip_slowfast_forward.5} parent=1 // pred_fallthru
      _
    // Predicated region
    $region6: #{clip_slowfast_forward.5} parent=1 // pred_check
      _
    $region7: #{clip_slowfast_forward.5} parent=1 // pred_check_branch
      %23 = sbr.rel (0) target = $region9
    $region8: #{clip_slowfast_forward.5} parent=1 // pred_region
      %s25 = ssub.s32 384, 384
      %26 = vsyncadd [#allocation7], %s25
      %s27 = sshll.u32 [#allocation6], 4
      %s28 = int_to_ptr.vmem [resolvable:$true] %s27
      %33 = dma.hbm_to_vmem [thread:$0]  %s1, 384, %s28, [#allocation7], 64, 64, 4
    $region9: #{clip_slowfast_forward.5} parent=1 // pred_fallthru
      _
    // Predicated region
    $region10: #{clip_slowfast_forward.5} parent=1 // pred_check
      _
    $region11: #{clip_slowfast_forward.5} parent=1 // pred_check_branch
      %35 = sbr.rel (0) target = $region13
    $region12: #{clip_slowfast_forward.5} parent=1 // pred_region
      %36 = dma.done [#allocation4], 128
    $region13: #{clip_slowfast_forward.5} parent=1 // pred_fallthru
      _
    // Predicated region
    $region14: #{clip_slowfast_forward.5} parent=1 // pred_check
      _
    $region15: #{clip_slowfast_forward.5} parent=1 // pred_check_branch
      %38 = sbr.rel (0) target = $region17
    $region16: #{clip_slowfast_forward.5} parent=1 // pred_region
      %39 = dma.done [#allocation7], 384
    $region17: #{clip_slowfast_forward.5} parent=1 // pred_fallthru
      _
    %p41 = scmp.eq.s32.totalorder 0, 0
    // Predicated region
    $region18: #{clip_slowfast_forward.5} parent=1 // pred_check
      %p42 = pneg %p41
    $region19: #{clip_slowfast_forward.5} parent=1 // pred_check_branch
      %44 = sbr.rel (%p42) target = $region21
    $region20: #{clip_slowfast_forward.5} parent=1 // pred_region
      %vm45 = vcmask 386048
      %46 = vst.msk [vmem:[#allocation2] sm:$0x3] %vm45, 0.0
    $region21: #{clip_slowfast_forward.5} parent=1 // pred_fallthru
      _
    %v47 = vld [vmem:[#allocation2] sm:$0x3]
    %v48 = vld [vmem:[#allocation3] sm:$0xf]
    %v49 = vld [vmem:[#allocation3 + $0x4] sm:$0xf]
    %v50 = vunpack.c.l.bf16 %v48
    %v51 = vunpack.c.l.bf16 %v49
    %vm52 = vcmask 392192
    %v53 = vsel %vm52, %v50, 0.0
    %v54 = vrot.slane %v53, 4
    %v55 = vadd.f32 %v53, %v54
    %v56 = vrot.slane %v55, 2
    %v57 = vadd.f32 %v55, %v56
    %v58 = vrot.slane %v57, 1
    %v59 = vadd.f32 %v57, %v58
    %v60 = vsel %vm52, %v51, 0.0
    %v61 = vrot.slane %v60, 4
    %v62 = vadd.f32 %v60, %v61
    %v63 = vrot.slane %v62, 2
    %v64 = vadd.f32 %v62, %v63
    %v65 = vrot.slane %v64, 1
    %v66 = vadd.f32 %v64, %v65
    %vm69 = vcmask 1041409
    %v70 = vsel %vm69, %v66, %v59
    %v72 = vadd.f32 %v47, %v70
    %vm73 = vcmask 386048
    %74 = vst.msk [vmem:[#allocation2] sm:$0x3] %vm73, %v72
    // Predicated region
    $region22: #{clip_slowfast_forward.5} parent=1 // pred_check
      %p75 = pneg %p41
    $region23: #{clip_slowfast_forward.5} parent=1 // pred_check_branch
      %77 = sbr.rel (%p75) target = $region25
    $region24: #{clip_slowfast_forward.5} parent=1 // pred_region
      %v78 = vld [vmem:[#allocation2] sm:$0x3]
      %v79 = vmul.f32 %v78, 0.125
      %v80 = vpack.c.bf16 %v79, %v79
      %v81 = vld [vmem:[#allocation6] sm:$0xf]
      %v82 = vld [vmem:[#allocation6 + $0x4] sm:$0xf]
      %v83 = vld [vmem:[#allocation6 + $0x8] sm:$0xf]
      %v84 = vld [vmem:[#allocation6 + $0xc] sm:$0xf]
      %v85 = vld [vmem:[#allocation6 + $0x10] sm:$0xf]
      %v86 = vld [vmem:[#allocation6 + $0x14] sm:$0xf]
      %v93 = vunpack.c.l.b16 %v81
      %v94 = vunpack.c.l.b16 %v82
      %v95 = vunpack.c.l.b16 %v83
      %v96 = vunpack.c.l.b16 %v84
      %v97 = vunpack.c.l.b16 %v85
      %v98 = vunpack.c.l.b16 %v86
      %v99 = vpack.c.b16 %v94, %v93
      %v100 = vpack.c.b16 %v96, %v95
      %v101 = vpack.c.b16 %v98, %v97
      %v106 = vsel %vm52, %v80, 0
      %108 = vmatprep.subr.bf16.mxu0 0
      %109 = vmatpush1.bf16.msra.mxu0 %v99
      %110 = vmatprep.subr.bf16.mxu0 0
      %111 = vmatpush1.bf16.msra.mxu0 %v100
      %112 = vmatprep.subr.bf16.mxu0 0
      %113 = vmatpush1.bf16.msra.mxu0 %v101
      %114 = vmatprep.subr.bf16.mxu0 0
      %115 = vmatpush1.bf16.msra.mxu0 0
      %116 = vmatprep.subr.bf16.mxu0 0
      %117 = vmatpush1.bf16.msra.mxu0 0
      %118 = vmatprep.subr.bf16.mxu0 0
      %119 = vmatpush1.bf16.msra.mxu0 0
      %120 = vmatprep.subr.bf16.mxu0 0
      %121 = vmatpush1.bf16.msra.mxu0 0
      %122 = vmatprep.subr.bf16.mxu0 0
      %123 = vmatpush1.bf16.msra.mxu0 0
      %124 = vmatprep.subr.bf16.mxu0 0
      %125 = vmatpush1.bf16.msra.mxu0 0
      %126 = vmatprep.subr.bf16.mxu0 0
      %127 = vmatpush1.bf16.msra.mxu0 0
      %128 = vmatprep.subr.bf16.mxu0 0
      %129 = vmatpush1.bf16.msra.mxu0 0
      %130 = vmatprep.subr.bf16.mxu0 0
      %131 = vmatpush1.bf16.msra.mxu0 0
      %132 = vmatprep.subr.bf16.mxu0 0
      %133 = vmatpush1.bf16.msra.mxu0 0
      %134 = vmatprep.subr.bf16.mxu0 0
      %135 = vmatpush1.bf16.msra.mxu0 0
      %136 = vmatprep.subr.bf16.mxu0 0
      %137 = vmatpush1.bf16.msra.mxu0 0
      %138 = vmatprep.subr.bf16.mxu0 0
      %139 = vmatpush1.bf16.msra.mxu0 0
      %140 = vmatprep.mubr.bf16.mxu0 0
      %141 = vmatmul.mubr.bf16.gmra.mrb[0].mxu0 %v106
      %v142 = vpop.f32.mrb[0].mxu0
      %v143 = vadd.f32 0.0, %v142
      %v144 = vpop.f32.mrb[0].mxu0
      %v145 = vpop.f32.mrb[0].mxu0
      %v146 = vpop.f32.mrb[0].mxu0
      %147 = vdwg.mxu0
      %v148 = vmul.f32 %v143, %v143
      %vm149 = vcmask 254976
      %v150 = vsel %vm149, %v148, 0.0
      %151 = vadd.xlane.f32.xlu0 %v150
      %v152 = vpop.xlane.xlu0 %151
      %v153 = vmax.f32 %v152, 1e-24
      %v154 = vrsqrt.pop %v153
      %v155 = vmul.f32 %v143, %v154
      %156 = vst.msk [vmem:[#allocation8] sm:$0x3] %vm149, %v155
    $region25: #{clip_slowfast_forward.5} parent=1 // pred_fallthru
      _
    // Predicated region
    $region26: #{clip_slowfast_forward.5} parent=1 // pred_check
      _
    $region27: #{clip_slowfast_forward.5} parent=1 // pred_check_branch
      %158 = sbr.rel (0) target = $region29
    $region28: #{clip_slowfast_forward.5} parent=1 // pred_region
      %s160 = ssub.s32 32, 32
      %161 = vsyncadd [#allocation5], %s160
      %s163 = sshll.u32 [#allocation8], 4
      %s164 = int_to_ptr.vmem [resolvable:$true] %s163
      %166 = dma.vmem_to_hbm [thread:$0]  %s164, 32, %s2, [#allocation5]
    $region29: #{clip_slowfast_forward.5} parent=1 // pred_fallthru
      _
    // Predicated region
    $region30: #{clip_slowfast_forward.5} parent=1 // pred_check
      _
    $region31: #{clip_slowfast_forward.5} parent=1 // pred_check_branch
      %168 = sbr.rel (0) target = $region33
    $region32: #{clip_slowfast_forward.5} parent=1 // pred_region
      %169 = dma.done [#allocation5], 32
    $region33: #{clip_slowfast_forward.5} parent=1 // pred_fallthru
      _
    %170 = vsyncpa [#allocation4], 1
    %171 = vsyncpa [#allocation7], 1
    %172 = vsyncpa [#allocation5], 1

</llo_original>
